<compile_context>
chip_gen: v7x
topology: tpu7x:2x2x1
jax: 0.10.0
libtpu: 0.0.40
codegen_flags: <defaults>
</compile_context>

<pallas_src>
import numpy as np
import jax
import jax.numpy as jnp
from jax.experimental import pallas as pl
from jax.experimental.pallas import tpu as pltpu


# ---------------------------------------------------------------------------
# Host-side helpers: pooling / upsampling as linear operators, tiling math
# ---------------------------------------------------------------------------
def _adaptive_avg_pool_matrix(in_size, out_size):
    """(out_size, in_size) matrix implementing nn.AdaptiveAvgPool1d semantics."""
    m = np.zeros((out_size, in_size), dtype=np.float32)
    for i in range(out_size):
        start = (i * in_size) // out_size
        end = -(-((i + 1) * in_size) // out_size)  # ceil div
        m[i, start:end] = 1.0 / float(end - start)
    return m


def _bilinear_upsample_matrix(out_size, in_size, align_corners=False):
    """(out_size, in_size) 1-D bilinear resize matrix."""
    # NOTE: modern F.interpolate default is align_corners=False; the original
    # PSPNet-era F.upsample behaved like align_corners=True.  Flag is exposed.
    m = np.zeros((out_size, in_size), dtype=np.float32)
    for h in range(out_size):
        if align_corners:
            src = 0.0 if out_size == 1 else h * (in_size - 1) / (out_size - 1)
        else:
            src = (h + 0.5) * in_size / out_size - 0.5
            src = max(src, 0.0)
        i0 = min(int(np.floor(src)), in_size - 1)
        i1 = min(i0 + 1, in_size - 1)
        w1 = src - i0
        m[h, i0] += 1.0 - w1
        m[h, i1] += w1
    return m


def _round_up(a, b):
    return -(-a // b) * b


def _pad_hw(hw):
    """Pad H*W to a lane-friendly extent (multiple of 128; 512 for big maps)."""
    hwp = _round_up(hw, 128)
    if hwp >= 1024:
        hwp = _round_up(hw, 512)
    return hwp


def _vmem_capacity_bytes():
    try:
        return int(pltpu.get_tpu_info().vmem_capacity_bytes)
    except Exception:
        return 64 * 1024 * 1024  # conservative: v7x per-TensorCore VMEM


def _pick_tile(hwp, cap, per_col_bytes, fixed_bytes, budget_bytes):
    """Largest multiple-of-128 tile dividing hwp, <= cap, fitting the VMEM budget."""
    best = 128
    t = 128
    limit = min(cap, hwp)
    while t <= limit:
        if hwp % t == 0 and fixed_bytes + per_col_bytes * t <= budget_bytes:
            best = t
        t += 128
    return best


def _vmem_limit(fixed_bytes, per_col_bytes, tile, capacity):
    need = fixed_bytes + per_col_bytes * tile + (8 << 20)
    return int(min(capacity, max(32 << 20, need)))


# ---------------------------------------------------------------------------
# Pass 1: pooled accumulation over HW tiles + stacked folded conv/BN/ReLU
# ---------------------------------------------------------------------------
def _make_pool_conv_kernel(write_identity):
    def kernel(*refs):
        if write_identity:
            x_ref, pt_ref, w_ref, bm_ref, z_ref, oid_ref, acc_ref = refs
        else:
            x_ref, pt_ref, w_ref, bm_ref, z_ref, acc_ref = refs

        j = pl.program_id(1)

        @pl.when(j == 0)
        def _init():
            acc_ref[...] = jnp.zeros_like(acc_ref)

        # One f32 matmul pools this HW tile for ALL pyramid levels at once.
        acc_ref[...] += jnp.dot(x_ref[0], pt_ref[...],
                                preferred_element_type=jnp.float32)

        if write_identity:
            # Identity channels of the final concatenated output: written here so
            # pass 2 never reads x from HBM again.
            oid_ref[0] = x_ref[0].astype(oid_ref.dtype)

        @pl.when(j == pl.num_programs(1) - 1)
        def _finish():
            # Stacked BN-folded 1x1 conv for all levels in a single matmul.
            y = jnp.dot(w_ref[...].astype(jnp.float32), acc_ref[...],
                        preferred_element_type=jnp.float32)          # (L*R, sum_ss)
            # bm holds the folded BN bias on the level-diagonal blocks and -1e30
            # elsewhere, so the ReLU zeroes cross-level products: z is the
            # block-diagonal "z_all".
            z_ref[0] = jnp.maximum(y + bm_ref[...], 0.0).astype(z_ref.dtype)

    return kernel


def _ppm_pool_conv(x_flat, params, tile_hw, write_identity, out_channels,
                   vmem_limit_bytes):
    n, c, hwp = x_flat.shape
    sum_ss = params["sum_ss"]
    lr = params["w_all"].shape[0]
    n_hw = hwp // tile_hw

    in_specs = [
        pl.BlockSpec((1, c, tile_hw), lambda i, j: (i, 0, j)),        # x tile
        pl.BlockSpec((tile_hw, sum_ss), lambda i, j: (j, 0)),         # pool mats^T
        pl.BlockSpec(params["w_all"].shape, lambda i, j: (0, 0)),     # stacked conv w
        pl.BlockSpec(params["bmask"].shape, lambda i, j: (0, 0)),     # bias/-inf mask
    ]
    inputs = [x_flat, params["pt_all"], params["w_all"], params["bmask"]]

    z_shape = jax.ShapeDtypeStruct((n, lr, sum_ss), jnp.float32)
    z_spec = pl.BlockSpec((1, lr, sum_ss), lambda i, j: (i, 0, 0))
    if write_identity:
        out_shape = (z_shape,
                     jax.ShapeDtypeStruct((n, out_channels, hwp), x_flat.dtype))
        out_specs = (z_spec,
                     pl.BlockSpec((1, c, tile_hw), lambda i, j: (i, 0, j)))
    else:
        out_shape = z_shape
        out_specs = z_spec

    flops = 2 * n * c * sum_ss * (hwp + lr)
    bytes_accessed = (x_flat.size * 4 + n * params["pt_all"].size * 4
                      + params["w_all"].size * 2 + n * lr * sum_ss * 4
                      + (x_flat.size * 4 if write_identity else 0))

    return pl.pallas_call(
        _make_pool_conv_kernel(write_identity),
        out_shape=out_shape,
        grid_spec=pltpu.PrefetchScalarGridSpec(
            num_scalar_prefetch=0,
            grid=(n, n_hw),
            in_specs=in_specs,
            out_specs=out_specs,
            scratch_shapes=[pltpu.VMEM((c, sum_ss), jnp.float32)],
        ),
        compiler_params=pltpu.CompilerParams(
            dimension_semantics=("parallel", "arbitrary"),
            vmem_limit_bytes=vmem_limit_bytes),
        cost_estimate=pl.CostEstimate(flops=int(flops), transcendentals=0,
                                      bytes_accessed=int(bytes_accessed)),
    )(*inputs)


# ---------------------------------------------------------------------------
# Pass 2a (aliased fast path): upsample each level straight into its channel
# slab of the pass-1 output buffer (x never re-read, no concatenate).
# ---------------------------------------------------------------------------
def _ppm_upsample_aliased(z_all, out_init, u_all, sum_ss, num_levels, c, r,
                          tile_hw, vmem_limit_bytes):
    n, out_channels, hwp = out_init.shape
    n_hw = hwp // tile_hw
    c_blk0 = c // r  # channel-block offset of the first pyramid level

    def kernel(z_ref, u_ref, alias_ref, o_ref):
        del alias_ref  # present only to alias pass-1's output into this output
        o_ref[0] = jnp.dot(z_ref[0], u_ref[...],
                           preferred_element_type=jnp.float32).astype(o_ref.dtype)

    in_specs = [
        pl.BlockSpec((1, r, sum_ss), lambda i, l, j: (i, l, 0)),      # z_l
        pl.BlockSpec((sum_ss, tile_hw), lambda i, l, j: (0, j)),      # upsample mats
        pl.BlockSpec(memory_space=pl.ANY),                            # aliased output
    ]
    out_spec = pl.BlockSpec((1, r, tile_hw), lambda i, l, j: (i, c_blk0 + l, j))

    flops = 2 * n * num_levels * r * sum_ss * hwp
    bytes_accessed = (z_all.size * 4 + n * u_all.size * 4
                      + n * num_levels * r * hwp * 4)

    return pl.pallas_call(
        kernel,
        out_shape=jax.ShapeDtypeStruct(out_init.shape, out_init.dtype),
        grid_spec=pltpu.PrefetchScalarGridSpec(
            num_scalar_prefetch=0,
            grid=(n, num_levels, n_hw),
            in_specs=in_specs,
            out_specs=out_spec,
        ),
        input_output_aliases={2: 0},
        compiler_params=pltpu.CompilerParams(
            dimension_semantics=("parallel", "parallel", "parallel"),
            vmem_limit_bytes=vmem_limit_bytes),
        cost_estimate=pl.CostEstimate(flops=int(flops), transcendentals=0,
                                      bytes_accessed=int(bytes_accessed)),
    )(z_all, u_all, out_init)


# ---------------------------------------------------------------------------
# Pass 2b (fallback for unaligned channel counts): re-read x, write full blocks
# with direct slab writes (still no in-kernel concatenate).
# ---------------------------------------------------------------------------
def _ppm_upsample_full(x_flat, z_all, u_all, sum_ss, c, out_channels,
                       tile_hw, vmem_limit_bytes):
    n, _, hwp = x_flat.shape
    lr = z_all.shape[1]
    n_hw = hwp // tile_hw

    def kernel(x_ref, z_ref, u_ref, o_ref):
        # Direct slab writes into the output block: no concat / no big temp.
        o_ref[0, :c, :] = x_ref[0].astype(o_ref.dtype)
        up = jnp.dot(z_ref[0], u_ref[...], preferred_element_type=jnp.float32)
        o_ref[0, c:, :] = up.astype(o_ref.dtype)

    in_specs = [
        pl.BlockSpec((1, c, tile_hw), lambda i, j: (i, 0, j)),
        pl.BlockSpec((1, lr, sum_ss), lambda i, j: (i, 0, 0)),
        pl.BlockSpec((sum_ss, tile_hw), lambda i, j: (0, j)),
    ]
    out_spec = pl.BlockSpec((1, out_channels, tile_hw), lambda i, j: (i, 0, j))

    flops = 2 * n * lr * sum_ss * hwp
    bytes_accessed = (x_flat.size * 4 + z_all.size * 4 + n * u_all.size * 4
                      + n * out_channels * hwp * 4)

    return pl.pallas_call(
        kernel,
        out_shape=jax.ShapeDtypeStruct((n, out_channels, hwp), x_flat.dtype),
        grid_spec=pltpu.PrefetchScalarGridSpec(
            num_scalar_prefetch=0,
            grid=(n, n_hw),
            in_specs=in_specs,
            out_specs=out_spec,
        ),
        compiler_params=pltpu.CompilerParams(
            dimension_semantics=("parallel", "parallel"),
            vmem_limit_bytes=vmem_limit_bytes),
        cost_estimate=pl.CostEstimate(flops=int(flops), transcendentals=0,
                                      bytes_accessed=int(bytes_accessed)),
    )(x_flat, z_all, u_all)


# ---------------------------------------------------------------------------
# Parameter setup (BN folded; pooling/conv/upsample matrices precomputed)
# ---------------------------------------------------------------------------
def init_ppm_params(key, in_dim, reduction_dim, setting, h, w,
                    eps=1e-5, align_corners=False):
    hw = h * w
    hwp = _pad_hw(hw)
    num_levels = len(setting)
    r = reduction_dim
    c = in_dim
    sum_ss = sum(s * s for s in setting)

    levels = []
    pt_cols, u_rows, w_rows = [], [], []
    bmask = np.full((num_levels * r, sum_ss), -1e30, dtype=np.float32)

    off = 0
    for idx, s in enumerate(setting):
        k1, k2, k3, k4, k5 = jax.random.split(jax.random.fold_in(key, idx), 5)
        conv_w = jax.random.normal(k1, (r, c), jnp.float32) * 0.1
        gamma = jax.random.uniform(k2, (r,), jnp.float32, 0.5, 1.5)
        beta = jax.random.normal(k3, (r,), jnp.float32) * 0.1
        rmean = jax.random.normal(k4, (r,), jnp.float32) * 0.1
        rvar = jax.random.uniform(k5, (r,), jnp.float32, 0.5, 1.5)
        scale = gamma / jnp.sqrt(rvar + eps)
        bias = np.asarray(beta - rmean * scale, dtype=np.float32)
        # Fold BN scale into the (bias-free) 1x1 conv weight; store in bf16.
        w_bf16 = (scale[:, None] * conv_w).astype(jnp.bfloat16)
        w_f32 = np.asarray(w_bf16.astype(jnp.float32))

        ph = _adaptive_avg_pool_matrix(h, s)                    # (s, H)
        pw = _adaptive_avg_pool_matrix(w, s)                    # (s, W)
        p = np.kron(ph, pw)                                     # (s*s, H*W)
        uh = _bilinear_upsample_matrix(h, s, align_corners)     # (H, s)
        uw = _bilinear_upsample_matrix(w, s, align_corners)     # (W, s)
        u = np.kron(uh, uw)                                     # (H*W, s*s)

        ss = s * s
        pt_cols.append(p.T)                                     # (HW, ss)
        u_rows.append(u.T)                                      # (ss, HW)
        w_rows.append(w_bf16)
        bmask[idx * r:(idx + 1) * r, off:off + ss] = bias[:, None]
        levels.append(dict(s=s, ss=ss, off=off, w_f32=w_f32, b=bias))
        off += ss

    pt_all = np.zeros((hwp, sum_ss), np.float32)
    pt_all[:hw, :] = np.concatenate(pt_cols, axis=1)
    u_all = np.zeros((sum_ss, hwp), np.float32)
    u_all[:, :hw] = np.concatenate(u_rows, axis=0)
    w_all = jnp.concatenate(w_rows, axis=0)                     # (L*R, C) bf16

    return dict(
        pt_all=jnp.asarray(pt_all, jnp.float32),
        u_all=jnp.asarray(u_all, jnp.float32),
        w_all=w_all,
        bmask=jnp.asarray(bmask, jnp.float32),
        levels=levels, sum_ss=sum_ss, hw=hw, hwp=hwp,
        in_dim=c, reduction_dim=r, num_levels=num_levels,
        align_corners=align_corners,
    )


# ---------------------------------------------------------------------------
# Forward wrapper
# ---------------------------------------------------------------------------
def pyramid_pooling_module(x, params, tile_hw_pool=None, tile_hw_up=None):
    """x: (N, C, H, W) float32 -> (N, C + len(setting)*R, H, W)."""
    n, c, h, w = x.shape
    assert c == params["in_dim"], (c, params["in_dim"])
    hw = h * w
    assert hw == params["hw"], "params were built for a different spatial size"
    hwp = params["hwp"]
    num_levels = params["num_levels"]
    r = params["reduction_dim"]
    lr = num_levels * r
    sum_ss = params["sum_ss"]
    out_channels = c + lr

    # Aliased fast path needs channel offsets that line up with TPU sublane /
    # block tiling; otherwise fall back to re-reading x in pass 2.
    aliased = (c % 8 == 0) and (r % 8 == 0) and (c % r == 0)

    capacity = _vmem_capacity_bytes()
    budget = int(capacity * 0.7)

    # Pass-1 VMEM footprint (double-buffered x/pool/identity tiles + resident
    # stacked conv weights, conservatively counted twice, + scratch + z block).
    fixed1 = (2 * params["w_all"].size * 2 + 2 * params["bmask"].size * 4
              + c * sum_ss * 4 + 2 * lr * sum_ss * 4)
    per_col1 = 2 * 4 * ((2 * c if aliased else c) + sum_ss)
    tile1 = tile_hw_pool if tile_hw_pool is not None else _pick_tile(
        hwp, 2048, per_col1, fixed1, budget)
    assert hwp % tile1 == 0, (hwp, tile1)
    vmem1 = _vmem_limit(fixed1, per_col1, tile1, capacity)

    # Pass-2 VMEM footprint.
    out_rows2 = r if aliased else out_channels
    extra2 = 0 if aliased else c
    fixed2 = 2 * (r if aliased else lr) * sum_ss * 4
    per_col2 = 2 * 4 * (out_rows2 + sum_ss + extra2)
    tile2 = tile_hw_up if tile_hw_up is not None else _pick_tile(
        hwp, 1024, per_col2, fixed2, budget)
    assert hwp % tile2 == 0, (hwp, tile2)
    vmem2 = _vmem_limit(fixed2, per_col2, tile2, capacity)

    x_flat = x.reshape(n, c, hw)
    if hwp != hw:
        x_flat = jnp.pad(x_flat, ((0, 0), (0, 0), (0, hwp - hw)))

    if aliased:
        z_all, out_init = _ppm_pool_conv(x_flat, params, tile1, True,
                                         out_channels, vmem1)
        out_flat = _ppm_upsample_aliased(z_all, out_init, params["u_all"],
                                         sum_ss, num_levels, c, r, tile2, vmem2)
    else:
        # TODO(synk): channel offsets don't line up with sublane tiling here, so
        # pass 2 re-reads x from HBM (one extra pass over x) and writes full blocks.
        z_all = _ppm_pool_conv(x_flat, params, tile1, False, out_channels, vmem1)
        out_flat = _ppm_upsample_full(x_flat, z_all, params["u_all"], sum_ss,
                                      c, out_channels, tile2, vmem2)

    if hwp != hw:
        out_flat = out_flat[:, :, :hw]
    return out_flat.reshape(n, out_channels, h, w)


# ---------------------------------------------------------------------------
# Pure-NumPy reference (independent per-level pooling; same folded params)
# ---------------------------------------------------------------------------
def _adaptive_pool_np(x, s):
    n, c, h, w = x.shape
    out = np.zeros((n, c, s, s), np.float32)
    for i in range(s):
        h0 = (i * h) // s
        h1 = -(-((i + 1) * h) // s)
        for j in range(s):
            w0 = (j * w) // s
            w1 = -(-((j + 1) * w) // s)
            out[:, :, i, j] = x[:, :, h0:h1, w0:w1].mean(axis=(2, 3))
    return out


def _reference(x, params):
    x = np.asarray(x, np.float32)
    n, c, h, w = x.shape
    outs = [x]
    for lv in params["levels"]:
        pooled = _adaptive_pool_np(x, lv["s"])                          # (N,C,s,s)
        y = np.einsum("rc,ncij->nrij", lv["w_f32"], pooled)
        z = np.maximum(y + lv["b"][None, :, None, None], 0.0)
        uh = _bilinear_upsample_matrix(h, lv["s"], params["align_corners"])
        uw = _bilinear_upsample_matrix(w, lv["s"], params["align_corners"])
        outs.append(np.einsum("hi,nrij,wj->nrhw", uh, z, uw))
    return np.concatenate(outs, axis=1)


# ---------------------------------------------------------------------------
# Self-test
# ---------------------------------------------------------------------------
if __name__ == "__main__":
    key = jax.random.PRNGKey(0)
    setting = (1, 2, 3, 6)

    # --- Test 1: aligned shapes -> aliased fast path (x streamed from HBM once),
    #     two HW tiles per pass to exercise the accumulation pipeline. ---
    kx, kp = jax.random.split(key)
    N, C, H, W, R = 2, 8, 16, 16, 8
    x = jax.random.normal(kx, (N, C, H, W), jnp.float32)
    params = init_ppm_params(kp, C, R, setting, H, W)
    fwd = jax.jit(lambda t: pyramid_pooling_module(
        t, params, tile_hw_pool=128, tile_hw_up=128))
    out = jax.block_until_ready(fwd(x))
    assert out.shape == (N, C + len(setting) * R, H, W), out.shape
    ref = _reference(x, params)
    np.testing.assert_allclose(np.asarray(out), ref, rtol=2e-2, atol=2e-2)
    # Identity pass-through channels must match exactly (x stays f32).
    np.testing.assert_allclose(np.asarray(out[:, :C]), np.asarray(x), atol=1e-6)

    # --- Test 2: unaligned channels + HW not a multiple of 128
    #     (zero-padded HW, full-block fallback path). ---
    kx2, kp2 = jax.random.split(jax.random.fold_in(key, 1))
    N2, C2, H2, W2, R2 = 2, 4, 10, 10, 4
    x2 = jax.random.normal(kx2, (N2, C2, H2, W2), jnp.float32)
    params2 = init_ppm_params(kp2, C2, R2, setting, H2, W2)
    fwd2 = jax.jit(lambda t: pyramid_pooling_module(t, params2))
    out2 = jax.block_until_ready(fwd2(x2))
    assert out2.shape == (N2, C2 + len(setting) * R2, H2, W2), out2.shape
    ref2 = _reference(x2, params2)
    np.testing.assert_allclose(np.asarray(out2), ref2, rtol=2e-2, atol=2e-2)
    np.testing.assert_allclose(np.asarray(out2[:, :C2]), np.asarray(x2), atol=1e-6)

    print("KERNEL_OK")
</pallas_src>

<mosaic_0001>
module attributes {stable_mosaic.version = 11 : i64} {
  func.func @kernel(%arg0: i32, %arg1: i32, %arg2: i32, %arg3: memref<1x8x50xf32, #tpu.memory_space<vmem>>, %arg4: memref<50x128xf32, #tpu.memory_space<vmem>>, %arg5: memref<2x40x256xf32, #tpu.memory_space<any>>, %arg6: memref<1x8x128xf32, #tpu.memory_space<vmem>>) attributes {dimension_semantics = [#tpu.dimension_semantics<parallel>, #tpu.dimension_semantics<parallel>, #tpu.dimension_semantics<parallel>], iteration_bounds = array<i64: 2, 4, 2>, scalar_prefetch = 0 : i64, scratch_operands = 0 : i64, tpu.core_type = #tpu.core_type<tc>, window_params = [{transform_indices = @transform_0, window_bounds = array<i64: 1, 8, 50>}, {transform_indices = @transform_1, window_bounds = array<i64: 50, 128>}, {}, {transform_indices = @transform_3, window_bounds = array<i64: 1, 8, 128>}]} {
    %c0 = arith.constant 0 : index
    %c0_0 = arith.constant 0 : index
    %c0_1 = arith.constant 0 : index
    %0 = vector.load %arg3[%c0, %c0_0, %c0_1] : memref<1x8x50xf32, #tpu.memory_space<vmem>>, vector<1x8x50xf32>
    %1 = vector.shape_cast %0 : vector<1x8x50xf32> to vector<8x50xf32>
    %c0_2 = arith.constant 0 : index
    %c0_3 = arith.constant 0 : index
    %2 = vector.load %arg4[%c0_2, %c0_3] : memref<50x128xf32, #tpu.memory_space<vmem>>, vector<50x128xf32>
    %cst = arith.constant dense<0.000000e+00> : vector<8x128xf32>
    %3 = tpu.matmul %1, %2, %cst {dimension_numbers = #tpu.dot_dimension_numbers<[1], [0], [0], [1], [0, 0, 1, 1], [], []>} : vector<8x50xf32>, vector<50x128xf32>, vector<8x128xf32> -> vector<8x128xf32>
    %c0_4 = arith.constant 0 : index
    %c0_5 = arith.constant 0 : index
    %c0_6 = arith.constant 0 : index
    %4 = vector.load %arg6[%c0_4, %c0_5, %c0_6] : memref<1x8x128xf32, #tpu.memory_space<vmem>>, vector<1x8x128xf32>
    %5 = vector.shape_cast %4 : vector<1x8x128xf32> to vector<8x128xf32>
    %6 = vector.shape_cast %3 : vector<8x128xf32> to vector<1x8x128xf32>
    tpu.vector_store %arg6[%c0_4, %c0_5, %c0_6], %6 {strides = array<i32>} : memref<1x8x128xf32, #tpu.memory_space<vmem>>, vector<1x8x128xf32>,
    return
  }
  func.func @transform_0(%arg0: i32, %arg1: i32, %arg2: i32) -> (i32, i32, i32) {
    %c0_i32 = arith.constant 0 : i32
    %c0_i32_0 = arith.constant 0 : i32
    return %arg0, %arg1, %c0_i32 : i32, i32, i32
  }
  func.func @transform_1(%arg0: i32, %arg1: i32, %arg2: i32) -> (i32, i32) {
    %c0_i32 = arith.constant 0 : i32
    %c0_i32_0 = arith.constant 0 : i32
    return %c0_i32, %arg2 : i32, i32
  }
  func.func @transform_3(%arg0: i32, %arg1: i32, %arg2: i32) -> (i32, i32, i32) {
    %c1_i32 = arith.constant 1 : i32
    %0 = arith.addi %c1_i32, %arg1 : i32
    %c0_i32 = arith.constant 0 : i32
    return %arg0, %0, %arg2 : i32, i32, i32
  }
}

module attributes {stable_mosaic.version = 11 : i64} {
  func.func @kernel(%arg0: i32, %arg1: i32, %arg2: memref<1x8x128xf32, #tpu.memory_space<vmem>>, %arg3: memref<128x50xf32, #tpu.memory_space<vmem>>, %arg4: memref<32x8xbf16, #tpu.memory_space<vmem>>, %arg5: memref<32x50xf32, #tpu.memory_space<vmem>>, %arg6: memref<1x32x50xf32, #tpu.memory_space<vmem>>, %arg7: memref<1x8x128xf32, #tpu.memory_space<vmem>>, %arg8: memref<8x50xf32, #tpu.memory_space<vmem>>) attributes {dimension_semantics = [#tpu.dimension_semantics<parallel>, #tpu.dimension_semantics<arbitrary>], iteration_bounds = array<i64: 2, 2>, scalar_prefetch = 0 : i64, scratch_operands = 1 : i64, tpu.core_type = #tpu.core_type<tc>, window_params = [{transform_indices = @transform_0, window_bounds = array<i64: 1, 8, 128>}, {transform_indices = @transform_1, window_bounds = array<i64: 128, 50>}, {pipeline_mode = #tpu.pipeline_mode<synchronous>, transform_indices = @transform_2, window_bounds = array<i64: 32, 8>}, {pipeline_mode = #tpu.pipeline_mode<synchronous>, transform_indices = @transform_3, window_bounds = array<i64: 32, 50>}, {transform_indices = @transform_4, window_bounds = array<i64: 1, 32, 50>}, {transform_indices = @transform_5, window_bounds = array<i64: 1, 8, 128>}]} {
    %c0_i32 = arith.constant 0 : i32
    %0 = arith.cmpi eq, %arg1, %c0_i32 : i32
    %1 = arith.extui %0 : i1 to i32
    %c0_i32_0 = arith.constant 0 : i32
    %2 = arith.cmpi ne, %1, %c0_i32_0 : i32
    scf.if %2 {
      %cst_16 = arith.constant 0.000000e+00 : f32
      %18 = vector.broadcast %cst_16 : f32 to vector<8x50xf32>
      %c0_17 = arith.constant 0 : index
      %c0_18 = arith.constant 0 : index
      %19 = vector.load %arg8[%c0_17, %c0_18] : memref<8x50xf32, #tpu.memory_space<vmem>>, vector<8x50xf32>
      tpu.vector_store %arg8[%c0_17, %c0_18], %18 {strides = array<i32>} : memref<8x50xf32, #tpu.memory_space<vmem>>, vector<8x50xf32>,
    } else {
    }
    %c0 = arith.constant 0 : index
    %c0_1 = arith.constant 0 : index
    %3 = vector.load %arg8[%c0, %c0_1] : memref<8x50xf32, #tpu.memory_space<vmem>>, vector<8x50xf32>
    %c0_2 = arith.constant 0 : index
    %c0_3 = arith.constant 0 : index
    %c0_4 = arith.constant 0 : index
    %4 = vector.load %arg2[%c0_2, %c0_3, %c0_4] : memref<1x8x128xf32, #tpu.memory_space<vmem>>, vector<1x8x128xf32>
    %5 = vector.shape_cast %4 : vector<1x8x128xf32> to vector<8x128xf32>
    %c0_5 = arith.constant 0 : index
    %c0_6 = arith.constant 0 : index
    %6 = vector.load %arg3[%c0_5, %c0_6] : memref<128x50xf32, #tpu.memory_space<vmem>>, vector<128x50xf32>
    %cst = arith.constant dense<0.000000e+00> : vector<8x50xf32>
    %7 = tpu.matmul %5, %6, %cst {dimension_numbers = #tpu.dot_dimension_numbers<[1], [0], [0], [1], [0, 0, 1, 1], [], []>} : vector<8x128xf32>, vector<128x50xf32>, vector<8x50xf32> -> vector<8x50xf32>
    %8 = arith.addf %3, %7 : vector<8x50xf32>
    %c0_7 = arith.constant 0 : index
    %c0_8 = arith.constant 0 : index
    %9 = vector.load %arg8[%c0_7, %c0_8] : memref<8x50xf32, #tpu.memory_space<vmem>>, vector<8x50xf32>
    tpu.vector_store %arg8[%c0_7, %c0_8], %8 {strides = array<i32>} : memref<8x50xf32, #tpu.memory_space<vmem>>, vector<8x50xf32>,
    %c0_9 = arith.constant 0 : index
    %c0_10 = arith.constant 0 : index
    %c0_11 = arith.constant 0 : index
    %10 = vector.load %arg2[%c0_9, %c0_10, %c0_11] : memref<1x8x128xf32, #tpu.memory_space<vmem>>, vector<1x8x128xf32>
    %11 = vector.shape_cast %10 : vector<1x8x128xf32> to vector<8x128xf32>
    %c0_12 = arith.constant 0 : index
    %c0_13 = arith.constant 0 : index
    %c0_14 = arith.constant 0 : index
    %12 = vector.load %arg7[%c0_12, %c0_13, %c0_14] : memref<1x8x128xf32, #tpu.memory_space<vmem>>, vector<1x8x128xf32>
    %13 = vector.shape_cast %12 : vector<1x8x128xf32> to vector<8x128xf32>
    %14 = vector.shape_cast %11 : vector<8x128xf32> to vector<1x8x128xf32>
    tpu.vector_store %arg7[%c0_12, %c0_13, %c0_14], %14 {strides = array<i32>} : memref<1x8x128xf32, #tpu.memory_space<vmem>>, vector<1x8x128xf32>,
    %c1_i32 = arith.constant 1 : i32
    %15 = arith.cmpi eq, %arg1, %c1_i32 : i32
    %16 = arith.extui %15 : i1 to i32
    %c0_i32_15 = arith.constant 0 : i32
    %17 = arith.cmpi ne, %16, %c0_i32_15 : i32
    scf.if %17 {
      %c0_16 = arith.constant 0 : index
      %c0_17 = arith.constant 0 : index
      %18 = vector.load %arg4[%c0_16, %c0_17] : memref<32x8xbf16, #tpu.memory_space<vmem>>, vector<32x8xbf16>
      %19 = arith.extf %18 : vector<32x8xbf16> to vector<32x8xf32>
      %c0_18 = arith.constant 0 : index
      %c0_19 = arith.constant 0 : index
      %20 = vector.load %arg8[%c0_18, %c0_19] : memref<8x50xf32, #tpu.memory_space<vmem>>, vector<8x50xf32>
      %cst_20 = arith.constant dense<0.000000e+00> : vector<32x50xf32>
      %21 = tpu.matmul %19, %20, %cst_20 {dimension_numbers = #tpu.dot_dimension_numbers<[1], [0], [0], [1], [0, 0, 1, 1], [], []>} : vector<32x8xf32>, vector<8x50xf32>, vector<32x50xf32> -> vector<32x50xf32>
      %c0_21 = arith.constant 0 : index
      %c0_22 = arith.constant 0 : index
      %22 = vector.load %arg5[%c0_21, %c0_22] : memref<32x50xf32, #tpu.memory_space<vmem>>, vector<32x50xf32>
      %23 = arith.addf %21, %22 : vector<32x50xf32>
      %cst_23 = arith.constant 0.000000e+00 : f32
      %24 = vector.broadcast %cst_23 : f32 to vector<32x50xf32>
      %25 = arith.maximumf %23, %24 : vector<32x50xf32>
      %c0_24 = arith.constant 0 : index
      %c0_25 = arith.constant 0 : index
      %c0_26 = arith.constant 0 : index
      %26 = vector.load %arg6[%c0_24, %c0_25, %c0_26] : memref<1x32x50xf32, #tpu.memory_space<vmem>>, vector<1x32x50xf32>
      %27 = vector.shape_cast %26 : vector<1x32x50xf32> to vector<32x50xf32>
      %28 = vector.shape_cast %25 : vector<32x50xf32> to vector<1x32x50xf32>
      tpu.vector_store %arg6[%c0_24, %c0_25, %c0_26], %28 {strides = array<i32>} : memref<1x32x50xf32, #tpu.memory_space<vmem>>, vector<1x32x50xf32>,
    } else {
    }
    return
  }
  func.func @transform_0(%arg0: i32, %arg1: i32) -> (i32, i32, i32) {
    %c0_i32 = arith.constant 0 : i32
    %c0_i32_0 = arith.constant 0 : i32
    return %arg0, %c0_i32, %arg1 : i32, i32, i32
  }
  func.func @transform_1(%arg0: i32, %arg1: i32) -> (i32, i32) {
    %c0_i32 = arith.constant 0 : i32
    %c0_i32_0 = arith.constant 0 : i32
    return %arg1, %c0_i32 : i32, i32
  }
  func.func @transform_2(%arg0: i32, %arg1: i32) -> (i32, i32) {
    %c0_i32 = arith.constant 0 : i32
    %c0_i32_0 = arith.constant 0 : i32
    %c0_i32_1 = arith.constant 0 : i32
    return %c0_i32, %c0_i32_0 : i32, i32
  }
  func.func @transform_3(%arg0: i32, %arg1: i32) -> (i32, i32) {
    %c0_i32 = arith.constant 0 : i32
    %c0_i32_0 = arith.constant 0 : i32
    %c0_i32_1 = arith.constant 0 : i32
    return %c0_i32, %c0_i32_0 : i32, i32
  }
  func.func @transform_4(%arg0: i32, %arg1: i32) -> (i32, i32, i32) {
    %c0_i32 = arith.constant 0 : i32
    %c0_i32_0 = arith.constant 0 : i32
    %c0_i32_1 = arith.constant 0 : i32
    return %arg0, %c0_i32, %c0_i32_0 : i32, i32, i32
  }
  func.func @transform_5(%arg0: i32, %arg1: i32) -> (i32, i32, i32) {
    %c0_i32 = arith.constant 0 : i32
    %c0_i32_0 = arith.constant 0 : i32
    return %arg0, %c0_i32, %arg1 : i32, i32, i32
  }
}

</mosaic_0001>

<llo_original>
// kernel: _lambda_.3
$region0: #{_lambda_.3}
  #allocation0 [shape = 'u32[]', space=smem, size = 0x4, offset = 0x4, fixed_abs, tag = 'smem constant byte address 0x4 - core index']
  #allocation1 [shape = 'u32[144,128]{1,0:T(1,128)}', space=vmem, size = 0x12000, scoped, tag = 'internal scratch']
  %s0 = inlined_call_operand.vmem [shape: f32[2,32,50], index: 0, kind: input, shape index: {}]
  %s1 = inlined_call_operand.vmem [shape: f32[50,256], index: 1, kind: input, shape index: {}]
  %s2 = inlined_call_operand.vmem [shape: f32[2,40,256], index: 2, kind: input, shape index: {}, may-alias: {2,3}]
  %s3 = inlined_call_operand.vmem [shape: f32[2,40,256], index: 3, kind: output, shape index: {}, may-alias: {2,3}]
  %s4 = sld [smem:[#allocation0]]
  $region79: #{_lambda_.3} parent=0
    _
  %s6 = ssub.s32 1, %s4
  %s7 = scalar_select 0, %s6, %s4
  $region1: #{_lambda_.3} parent=0
    #allocation2 [shape = 'u8[57344]{0}', space=vmem, size = 0xe000, scoped, tag = 'input window, operand 1']
    loop: start=0, step=1, limit=18
    $region2: #{_lambda_.3} parent=1 // loop_pre_header
      _
    $region3: #{_lambda_.3} parent=1 // loop_header
      %s9 = sphi 0, %s13
      %p10 = scmp.ge.s32.totalorder %s9, 18
      %s16 = sphi 0, %s35
      %s17 = sphi 0, %s31
      %s18 = sphi 0, %s27
      %s19 = sphi 0, %s16
      %s20 = sphi 0, %s17
      %s21 = sphi 0, %s18
      %s22 = sphi 0, %s19
      %s23 = sphi 0, %s20
      %s24 = sphi 0, %s21
      %s40 = sphi 0, %s42
      %s43 = sphi 0, %s40
      %s44 = sphi 0, %s43
      %s60 = sphi 0, %s44
      %s66 = sphi 0, %s68
      %s69 = sphi 0, %s66
      %s70 = sphi 0, %s69
      %s86 = sphi 0, %s70
      %s98 = sphi 0, %s100
      %s101 = sphi 0, %s98
      %s102 = sphi 0, %s101
      %s118 = sphi 0, %s102
    $region4: #{_lambda_.3} parent=1 // loop_header_branch
      %12 = sbr.rel (%p10) target = $region8
    $region5: #{_lambda_.3} parent=1 // loop_body
      %s14 = ssub.s32 %s9, 1
      %s15 = ssub.s32 %s9, 2
      %s25 = sadd.s32 1, %s18
      %p26 = scmp.ge.s32.totalorder %s25, 2
      %s27 = scalar_select %p26, 0, %s25
      %s28 = sadd.s32 1, %s17
      %s29 = scalar_select %p26, %s28, %s17
      %p30 = scmp.ge.s32.totalorder %s29, 4
      %s31 = scalar_select %p30, 0, %s29
      %s32 = sadd.s32 1, %s16
      %s33 = scalar_select %p30, %s32, %s16
      %p34 = scmp.ge.s32.totalorder %s33, 2
      %s35 = scalar_select %p34, 0, %s33
      %s36 = ssub.s32 %s16, %s35
      %s37 = ssub.s32 %s17, %s31
      %s38 = sor.u32 %s36, %s37
      %p39 = scmp.eq.s32.totalorder %s38, 0
      %s41 = sadd.s32 %s40, 1
      %s42 = scalar_select %p39, %s40, %s41
      %p45 = pneg %p39
      %p46 = scmp.eq.s32.totalorder %s9, 15
      %p47 = por %p45, %p46
      %p48 = scmp.ne.s32.totalorder %s40, %s43
      %p49 = scmp.eq.s32.totalorder %s9, 0
      %p50 = por %p48, %p49
      %p51 = scmp.ne.s32.totalorder %s40, %s43
      %p52 = scmp.eq.s32.totalorder %s14, 15
      %p53 = por %p51, %p52
      %p54 = scmp.ne.s32.totalorder %s43, %s44
      %p55 = scmp.eq.s32.totalorder %s14, 0
      %p56 = por %p54, %p55
      %p57 = scmp.ne.s32.totalorder %s43, %s44
      %p58 = scmp.eq.s32.totalorder %s15, 15
      %p59 = por %p57, %p58
      %p61 = scmp.ne.s32.totalorder %s44, %s60
      %p62 = scmp.eq.s32.totalorder %s15, 0
      %p63 = por %p61, %p62
      %s64 = ssub.s32 %s18, %s27
      %p65 = scmp.eq.s32.totalorder %s64, 0
      %s67 = sadd.s32 %s66, 1
      %s68 = scalar_select %p65, %s66, %s67
      %p71 = pneg %p65
      %p72 = scmp.eq.s32.totalorder %s9, 15
      %p73 = por %p71, %p72
      %p74 = scmp.ne.s32.totalorder %s66, %s69
      %p75 = scmp.eq.s32.totalorder %s9, 0
      %p76 = por %p74, %p75
      %p77 = scmp.ne.s32.totalorder %s66, %s69
      %p78 = scmp.eq.s32.totalorder %s14, 15
      %p79 = por %p77, %p78
      %p80 = scmp.ne.s32.totalorder %s69, %s70
      %p81 = scmp.eq.s32.totalorder %s14, 0
      %p82 = por %p80, %p81
      %p83 = scmp.ne.s32.totalorder %s69, %s70
      %p84 = scmp.eq.s32.totalorder %s15, 15
      %p85 = por %p83, %p84
      %p87 = scmp.ne.s32.totalorder %s70, %s86
      %p88 = scmp.eq.s32.totalorder %s15, 0
      %p89 = por %p87, %p88
      %s90 = sadd.s32 %s17, 1
      %s91 = sadd.s32 %s31, 1
      %s92 = ssub.s32 %s16, %s35
      %s93 = ssub.s32 %s90, %s91
      %s94 = sor.u32 %s92, %s93
      %s95 = ssub.s32 %s18, %s27
      %s96 = sor.u32 %s94, %s95
      %p97 = scmp.eq.s32.totalorder %s96, 0
      %s99 = sadd.s32 %s98, 1
      %s100 = scalar_select %p97, %s98, %s99
      %p103 = pneg %p97
      %p104 = scmp.eq.s32.totalorder %s9, 15
      %p105 = por %p103, %p104
      %p106 = scmp.ne.s32.totalorder %s98, %s101
      %p107 = scmp.eq.s32.totalorder %s9, 0
      %p108 = por %p106, %p107
      %p109 = scmp.ne.s32.totalorder %s98, %s101
      %p110 = scmp.eq.s32.totalorder %s14, 15
      %p111 = por %p109, %p110
      %p112 = scmp.ne.s32.totalorder %s101, %s102
      %p113 = scmp.eq.s32.totalorder %s14, 0
      %p114 = por %p112, %p113
      %p115 = scmp.ne.s32.totalorder %s101, %s102
      %p116 = scmp.eq.s32.totalorder %s15, 15
      %p117 = por %p115, %p116
      %p119 = scmp.ne.s32.totalorder %s102, %s118
      %p120 = scmp.eq.s32.totalorder %s15, 0
      %p121 = por %p119, %p120
      %p122 = scmp.le.s32.totalorder 1, %s9
      %p123 = scmp.lt.s32.totalorder %s9, 17
      %p124 = pnand %p122, %p123
      %p125 = pneg %p124
      // Predicated region
      $region9: #{_lambda_.3} parent=5 // pred_check
        _
      $region10: #{_lambda_.3} parent=5 // pred_check_branch
        %127 = sbr.rel (%p124) target = $region12
      $region11: #{_lambda_.3} parent=5 // pred_region
        %s128 = ssub.s32 %s9, 1
      $region12: #{_lambda_.3} parent=5 // pred_fallthru
        _
      %p129 = scmp.lt.s32.totalorder %s9, 16
      // Predicated region
      $region13: #{_lambda_.3} parent=5 // pred_check
        %p130 = pneg %p129
      $region14: #{_lambda_.3} parent=5 // pred_check_branch
        %132 = sbr.rel (%p130) target = $region16
      $region15: #{_lambda_.3} parent=5 // pred_region
        // Predicated region
        $region17: #{_lambda_.3} parent=15 // pred_check
          %p133 = pneg %p50
        $region18: #{_lambda_.3} parent=15 // pred_check_branch
          %135 = sbr.rel (%p133) target = $region20
        $region19: #{_lambda_.3} parent=15 // pred_region
          %p136 = scmp.lt.s32.totalorder %s16, 1
          %s137 = scalar_select %p136, %s16, 1
          %p138 = scmp.lt.s32.totalorder %s17, 3
          %s139 = scalar_select %p138, %s17, 3
          %s140 = smul.addr %s137, 4
          %s141 = sadd.s32 %s139, %s140
          %s142 = smul.addr %s141, 8
          %s143 = scalar_lea.vmem %s0, %s142
        $region20: #{_lambda_.3} parent=15 // pred_fallthru
          _
        // Predicated region
        $region21: #{_lambda_.3} parent=15 // pred_check
          %p144 = pneg %p76
        $region22: #{_lambda_.3} parent=15 // pred_check_branch
          %146 = sbr.rel (%p144) target = $region24
        $region23: #{_lambda_.3} parent=15 // pred_region
          %s147 = sand.u32 %s66, 1
          %s148 = sand.u32 %s66, 1
          %s149 = smul.addr %s148, 56
          %s150 = scalar_lea.vmem [#allocation2], %s149
          %s151 = smul.addr %s18, 8
          %s152 = scalar_lea.vmem %s1, %s151
          // Predicated region
          $region25: #{_lambda_.3} parent=23 // pred_check
            _
          $region26: #{_lambda_.3} parent=23 // pred_check_branch
            %154 = sbr.rel (0) target = $region28
          $region27: #{_lambda_.3} parent=23 // pred_region
            // Predicated region
            $region29: #{_lambda_.3} parent=27 // pred_check
              _
            $region30: #{_lambda_.3} parent=27 // pred_check_branch
              %156 = sbr.rel (0) target = $region32
            $region31: #{_lambda_.3} parent=27 // pred_region
              // Predicated region
              $region44: #{_lambda_.3} parent=31 // pred_check
                _
              $region45: #{_lambda_.3} parent=31 // pred_check_branch
                %183 = sbr.rel (0) target = $region47
              $region46: #{_lambda_.3} parent=31 // pred_region
                loop: start=0, step=1, limit=1
                $region48: #{_lambda_.3} parent=46 // loop_pre_header
                  _
                $region49: #{_lambda_.3} parent=46 // loop_header
                  %s185 = sphi 0, %s189
                  %p186 = scmp.ge.s32.totalorder %s185, 1
                  %s190 = sphi %s152, %s152
                  %s191 = sphi %s150, %s150
                $region50: #{_lambda_.3} parent=46 // loop_header_branch
                  %188 = sbr.rel (%p186) target = $region54
                $region51: #{_lambda_.3} parent=46 // loop_body
                  %v192 = vld [vmem:[%s190] sm:$0xff]
                  %193 = vst [vmem:[%s191] sm:$0xff] %v192
                  %v194 = vld [vmem:[%s190 + $0x10] sm:$0xff]
                  %195 = vst [vmem:[%s191 + $0x8] sm:$0xff] %v194
                  %v196 = vld [vmem:[%s190 + $0x20] sm:$0xff]
                  %197 = vst [vmem:[%s191 + $0x10] sm:$0xff] %v196
                  %v198 = vld [vmem:[%s190 + $0x30] sm:$0xff]
                  %199 = vst [vmem:[%s191 + $0x18] sm:$0xff] %v198
                  %v200 = vld [vmem:[%s190 + $0x40] sm:$0xff]
                  %201 = vst [vmem:[%s191 + $0x20] sm:$0xff] %v200
                  %v202 = vld [vmem:[%s190 + $0x50] sm:$0xff]
                  %203 = vst [vmem:[%s191 + $0x28] sm:$0xff] %v202
                  %v204 = vld [vmem:[%s190 + $0x60] sm:$0xff]
                  %205 = vst [vmem:[%s191 + $0x30] sm:$0xff] %v204
                $region52: #{_lambda_.3} parent=46 // loop_footer
                  %s189 = sadd.s32 1, %s185
                $region53: #{_lambda_.3} parent=46 // loop_footer_branch
                  %184 = sbr.rel target = $region49
                $region54: #{_lambda_.3} parent=46 // loop_exit
                  _
              $region47: #{_lambda_.3} parent=31 // pred_fallthru
                _
              // Predicated region
              $region55: #{_lambda_.3} parent=31 // pred_check
                _
              $region56: #{_lambda_.3} parent=31 // pred_check_branch
                %207 = sbr.rel target = $region58
              $region57: #{_lambda_.3} parent=31 // pred_region
                _
              $region58: #{_lambda_.3} parent=31 // pred_fallthru
                _
            $region32: #{_lambda_.3} parent=27 // pred_fallthru
              _
            // Predicated region
            $region33: #{_lambda_.3} parent=27 // pred_check
              _
            $region34: #{_lambda_.3} parent=27 // pred_check_branch
              %158 = sbr.rel target = $region36
            $region35: #{_lambda_.3} parent=27 // pred_region
              loop: start=0, step=1, limit=1
              $region37: #{_lambda_.3} parent=35 // loop_pre_header
                _
              $region38: #{_lambda_.3} parent=35 // loop_header
                %s161 = sphi 0, %s165
                %p162 = scmp.ge.s32.totalorder %s161, 1
                %s166 = sphi %s152, %s152
                %s167 = sphi %s150, %s150
              $region39: #{_lambda_.3} parent=35 // loop_header_branch
                %164 = sbr.rel (%p162) target = $region43
              $region40: #{_lambda_.3} parent=35 // loop_body
                %v168 = vld [vmem:[%s166] sm:$0xff]
                %169 = vst [vmem:[%s167] sm:$0xff] %v168
                %v170 = vld [vmem:[%s166 + $0x10] sm:$0xff]
                %171 = vst [vmem:[%s167 + $0x8] sm:$0xff] %v170
                %v172 = vld [vmem:[%s166 + $0x20] sm:$0xff]
                %173 = vst [vmem:[%s167 + $0x10] sm:$0xff] %v172
                %v174 = vld [vmem:[%s166 + $0x30] sm:$0xff]
                %175 = vst [vmem:[%s167 + $0x18] sm:$0xff] %v174
                %v176 = vld [vmem:[%s166 + $0x40] sm:$0xff]
                %177 = vst [vmem:[%s167 + $0x20] sm:$0xff] %v176
                %v178 = vld [vmem:[%s166 + $0x50] sm:$0xff]
                %179 = vst [vmem:[%s167 + $0x28] sm:$0xff] %v178
                %v180 = vld [vmem:[%s166 + $0x60] sm:$0xff]
                %181 = vst [vmem:[%s167 + $0x30] sm:$0xff] %v180
              $region41: #{_lambda_.3} parent=35 // loop_footer
                %s165 = sadd.s32 1, %s161
              $region42: #{_lambda_.3} parent=35 // loop_footer_branch
                %160 = sbr.rel target = $region38
              $region43: #{_lambda_.3} parent=35 // loop_exit
                _
            $region36: #{_lambda_.3} parent=27 // pred_fallthru
              _
          $region28: #{_lambda_.3} parent=23 // pred_fallthru
            _
          %208 = vnop
        $region24: #{_lambda_.3} parent=15 // pred_fallthru
          _
      $region16: #{_lambda_.3} parent=5 // pred_fallthru
        _
      %p209 = scmp.le.s32.totalorder 1, %s9
      %p210 = scmp.lt.s32.totalorder %s9, 17
      %p211 = pnand %p209, %p210
      %p212 = pneg %p211
      // Predicated region
      $region59: #{_lambda_.3} parent=5 // pred_check
        _
      $region60: #{_lambda_.3} parent=5 // pred_check_branch
        %214 = sbr.rel (%p211) target = $region62
      $region61: #{_lambda_.3} parent=5 // pred_region
        %s215 = ssub.s32 %s9, 1
        %s216 = sand.u32 %s69, 1
        %s217 = sand.u32 %s69, 1
        %s218 = smul.addr %s217, 56
        %s219 = scalar_lea.vmem [#allocation2], %s218
        // Predicated region
        $region63: #{_lambda_.3} parent=61 // pred_check
          %p220 = pneg %p82
        $region64: #{_lambda_.3} parent=61 // pred_check_branch
          %222 = sbr.rel (%p220) target = $region66
        $region65: #{_lambda_.3} parent=61 // pred_region
          _
        $region66: #{_lambda_.3} parent=61 // pred_fallthru
          _
        %p223 = scmp.lt.s32.totalorder %s19, 1
        %s224 = scalar_select %p223, %s19, 1
        %p225 = scmp.lt.s32.totalorder %s20, 3
        %s226 = scalar_select %p225, %s20, 3
        %s227 = smul.addr %s224, 4
        %s228 = sadd.s32 %s226, %s227
        %s229 = smul.addr %s228, 8
        %s230 = scalar_lea.vmem %s0, %s229
        %p231 = pneg %p56
        %p232 = pneg %p53
        %s233 = sand.u32 %s69, 1
        %s234 = sand.u32 %s69, 1
        %s235 = smul.addr %s234, 56
        %s236 = scalar_lea.vmem [#allocation2], %s235
        %p237 = pneg %p82
        %p238 = pneg %p79
        %p239 = pneg %p114
        %p240 = pneg %p111
        %s241 = sadd.s32 %s20, 1
        %p242 = scmp.lt.s32.totalorder %s19, 1
        %s243 = scalar_select %p242, %s19, 1
        %p244 = scmp.lt.s32.totalorder %s241, 4
        %s245 = scalar_select %p244, %s241, 4
        %p246 = scmp.lt.s32.totalorder %s21, 1
        %s247 = scalar_select %p246, %s21, 1
        %s248 = smul.addr %s245, 2
        %s249 = sadd.s32 %s247, %s248
        %s250 = smul.addr %s243, 10
        %s251 = sadd.s32 %s249, %s250
        %s252 = smul.addr %s251, 8
        %s253 = scalar_lea.vmem %s3, %s252
        %p254 = scmp.lt.s32.totalorder %s19, 1
        %s255 = scalar_select %p254, %s19, 1
        %p256 = scmp.lt.s32.totalorder %s20, 3
        %s257 = scalar_select %p256, %s20, 3
        %s258 = smul.addr %s255, 4
        %s259 = sadd.s32 %s257, %s258
        %s260 = smul.addr %s259, 8
        %s261 = scalar_lea.vmem %s0, %s260
        %s262 = sadd.s32 %s20, 1
        %p263 = scmp.lt.s32.totalorder %s19, 1
        %s264 = scalar_select %p263, %s19, 1
        %p265 = scmp.lt.s32.totalorder %s262, 4
        %s266 = scalar_select %p265, %s262, 4
        %p267 = scmp.lt.s32.totalorder %s21, 1
        %s268 = scalar_select %p267, %s21, 1
        %s269 = smul.addr %s266, 2
        %s270 = sadd.s32 %s268, %s269
        %s271 = smul.addr %s264, 10
        %s272 = sadd.s32 %s270, %s271
        %s273 = smul.addr %s272, 8
        %s274 = scalar_lea.vmem %s3, %s273
        %s275 = sadd.s32 %s20, 1
        %v276 = vld [vmem:[%s261] sm:$0xff]
        %v277 = vld [vmem:[%s219] sm:$0xff]
        %v278 = vld [vmem:[%s219 + $0x8] sm:$0xff]
        %v279 = vld [vmem:[%s219 + $0x10] sm:$0xff]
        %v280 = vld [vmem:[%s219 + $0x18] sm:$0xff]
        %v281 = vld [vmem:[%s219 + $0x20] sm:$0xff]
        %v282 = vld [vmem:[%s219 + $0x28] sm:$0xff]
        %v283 = vld [vmem:[%s219 + $0x30] sm:$0x3]
        %vm284 = vcmask 408576
        %v286 = vsel %vm284, %v276, 0
        %vm288 = vcmask 1041408
        %v290 = vsel %vm288, %v283, 0
        %292 = vmatprep.subr.mxu0 0.0
        %293 = vmatpush1.msra.mxu0 %v277
        %294 = vmatprep.subr.mxu0 0.0
        %295 = vmatpush1.msra.mxu0 %v278
        %296 = vmatprep.subr.mxu0 0.0
        %297 = vmatpush1.msra.mxu0 %v279
        %298 = vmatprep.subr.mxu0 0.0
        %299 = vmatpush1.msra.mxu0 %v280
        %300 = vmatprep.subr.mxu0 0.0
        %301 = vmatpush1.msra.mxu0 %v281
        %302 = vmatprep.subr.mxu0 0.0
        %303 = vmatpush1.msra.mxu0 %v282
        %304 = vmatprep.subr.mxu0 0.0
        %305 = vmatpush1.msra.mxu0 %v290
        %306 = vmatprep.subr.mxu0 0.0
        %307 = vmatpush1.msra.mxu0 0.0
        %308 = vmatprep.subr.mxu0 0.0
        %309 = vmatpush1.msra.mxu0 0.0
        %310 = vmatprep.subr.mxu0 0.0
        %311 = vmatpush1.msra.mxu0 0.0
        %312 = vmatprep.subr.mxu0 0.0
        %313 = vmatpush1.msra.mxu0 0.0
        %314 = vmatprep.subr.mxu0 0.0
        %315 = vmatpush1.msra.mxu0 0.0
        %316 = vmatprep.subr.mxu0 0.0
        %317 = vmatpush1.msra.mxu0 0.0
        %318 = vmatprep.subr.mxu0 0.0
        %319 = vmatpush1.msra.mxu0 0.0
        %320 = vmatprep.subr.mxu0 0.0
        %321 = vmatpush1.msra.mxu0 0.0
        %322 = vmatprep.subr.mxu0 0.0
        %323 = vmatpush1.msra.mxu0 0.0
        %324 = vmatprep.subr.mxu0 0.0
        %325 = vmatpush1.msra.mxu0 0.0
        %326 = vmatprep.subr.mxu0 0.0
        %327 = vmatpush1.msra.mxu0 0.0
        %328 = vmatprep.subr.mxu0 0.0
        %329 = vmatpush1.msra.mxu0 0.0
        %330 = vmatprep.subr.mxu0 0.0
        %331 = vmatpush1.msra.mxu0 0.0
        %332 = vmatprep.subr.mxu0 0.0
        %333 = vmatpush1.msra.mxu0 0.0
        %334 = vmatprep.subr.mxu0 0.0
        %335 = vmatpush1.msra.mxu0 0.0
        %336 = vmatprep.subr.mxu0 0.0
        %337 = vmatpush1.msra.mxu0 0.0
        %338 = vmatprep.subr.mxu0 0.0
        %339 = vmatpush1.msra.mxu0 0.0
        %340 = vmatprep.subr.mxu0 0.0
        %341 = vmatpush1.msra.mxu0 0.0
        %342 = vmatprep.subr.mxu0 0.0
        %343 = vmatpush1.msra.mxu0 0.0
        %344 = vmatprep.subr.mxu0 0.0
        %345 = vmatpush1.msra.mxu0 0.0
        %346 = vmatprep.subr.mxu0 0.0
        %347 = vmatpush1.msra.mxu0 0.0
        %348 = vmatprep.subr.mxu0 0.0
        %349 = vmatpush1.msra.mxu0 0.0
        %350 = vmatprep.subr.mxu0 0.0
        %351 = vmatpush1.msra.mxu0 0.0
        %352 = vmatprep.subr.mxu0 0.0
        %353 = vmatpush1.msra.mxu0 0.0
        %354 = vmatprep.subr.mxu0 0.0
        %355 = vmatpush1.msra.mxu0 0.0
        %356 = vmatprep.mubr.f32.mxu0 0.0
        %357 = vmatmul.mubr.f32.gmra.mrb[0].mxu0 %v286
        %v358 = vpop.f32.mrb[0].mxu0
        %v359 = vadd.f32 0.0, %v358
        %v360 = vpop.f32.mrb[0].mxu0
        %361 = vdwg.mxu0
        %362 = vst [vmem:[%s274] sm:$0xff] %v359
        %s363 = sadd.s32 %s20, 1
        %p364 = scmp.lt.s32.totalorder %s19, 1
        %s365 = scalar_select %p364, %s19, 1
        %p366 = scmp.lt.s32.totalorder %s363, 4
        %s367 = scalar_select %p366, %s363, 4
        %p368 = scmp.lt.s32.totalorder %s21, 1
        %s369 = scalar_select %p368, %s21, 1
        %s370 = smul.addr %s367, 2
        %s371 = sadd.s32 %s369, %s370
        %s372 = smul.addr %s365, 10
        %s373 = sadd.s32 %s371, %s372
        %s374 = smul.addr %s373, 8
        %s375 = scalar_lea.vmem %s3, %s374
        // Predicated region
        $region67: #{_lambda_.3} parent=61 // pred_check
          %p376 = pneg %p111
        $region68: #{_lambda_.3} parent=61 // pred_check_branch
          %378 = sbr.rel (%p376) target = $region70
        $region69: #{_lambda_.3} parent=61 // pred_region
          %s379 = sadd.s32 %s20, 1
        $region70: #{_lambda_.3} parent=61 // pred_fallthru
          _
      $region62: #{_lambda_.3} parent=5 // pred_fallthru
        _
      %p380 = scmp.le.s32.totalorder 2, %s9
      // Predicated region
      $region71: #{_lambda_.3} parent=5 // pred_check
        %p381 = pneg %p380
      $region72: #{_lambda_.3} parent=5 // pred_check_branch
        %383 = sbr.rel (%p381) target = $region74
      $region73: #{_lambda_.3} parent=5 // pred_region
        %s384 = ssub.s32 %s9, 2
        // Predicated region
        $region75: #{_lambda_.3} parent=73 // pred_check
          %p385 = pneg %p117
        $region76: #{_lambda_.3} parent=73 // pred_check_branch
          %387 = sbr.rel (%p385) target = $region78
        $region77: #{_lambda_.3} parent=73 // pred_region
          %s388 = sadd.s32 %s23, 1
          %p389 = scmp.lt.s32.totalorder %s22, 1
          %s390 = scalar_select %p389, %s22, 1
          %p391 = scmp.lt.s32.totalorder %s388, 4
          %s392 = scalar_select %p391, %s388, 4
          %p393 = scmp.lt.s32.totalorder %s24, 1
          %s394 = scalar_select %p393, %s24, 1
          %s395 = smul.addr %s392, 2
          %s396 = sadd.s32 %s394, %s395
          %s397 = smul.addr %s390, 10
          %s398 = sadd.s32 %s396, %s397
          %s399 = smul.addr %s398, 8
          %s400 = scalar_lea.vmem %s3, %s399
        $region78: #{_lambda_.3} parent=73 // pred_fallthru
          _
      $region74: #{_lambda_.3} parent=5 // pred_fallthru
        _
    $region6: #{_lambda_.3} parent=1 // loop_footer
      %s13 = sadd.s32 1, %s9
    $region7: #{_lambda_.3} parent=1 // loop_footer_branch
      %8 = sbr.rel target = $region3
    $region8: #{_lambda_.3} parent=1 // loop_exit
      _

// kernel: _lambda_.2
$region0: #{_lambda_.2}
  #allocation0 [shape = 'u32[]', space=smem, size = 0x4, offset = 0x4, fixed_abs, tag = 'smem constant byte address 0x4 - core index']
  #allocation1 [shape = 'u32[144,128]{1,0:T(1,128)}', space=vmem, size = 0x12000, scoped, tag = 'internal scratch']
  #allocation2 [shape = 'f32[8,50]{1,0:T(8,128)}', space=vmem, size = 0x1000, scoped, tag = 'scratch operand']
  %s0 = inlined_call_operand.vmem [shape: f32[2,8,256], index: 0, kind: input, shape index: {}]
  %s1 = inlined_call_operand.vmem [shape: f32[256,50], index: 1, kind: input, shape index: {}]
  %s2 = inlined_call_operand.vmem [shape: bf16[32,8], index: 2, kind: input, shape index: {}]
  %s3 = inlined_call_operand.vmem [shape: f32[32,50], index: 3, kind: input, shape index: {}]
  %s4 = inlined_call_operand.vmem [shape: f32[2,32,50], index: 4, kind: output, shape index: {0}]
  %s5 = inlined_call_operand.vmem [shape: f32[2,40,256], index: 5, kind: output, shape index: {1}]
  %6 = xla_tuple %s4, %s5
  %s7 = sld [smem:[#allocation0]]
  $region65: #{_lambda_.2} parent=0
    _
  %s9 = ssub.s32 1, %s7
  %s10 = scalar_select 0, %s9, %s7
  loop: start=0, step=1, limit=6
  $region2: #{_lambda_.2} parent=0 // loop_pre_header
    _
  $region3: #{_lambda_.2} parent=0 // loop_header
    %s12 = sphi 0, %s16
    %p13 = scmp.ge.s32.totalorder %s12, 6
    %s19 = sphi 0, %s31
    %s20 = sphi 0, %s27
    %s21 = sphi 0, %s19
    %s22 = sphi 0, %s20
    %s23 = sphi 0, %s21
    %s24 = sphi 0, %s22
    %s36 = sphi 0, %s38
    %s39 = sphi 0, %s36
    %s40 = sphi 0, %s39
    %s56 = sphi 0, %s40
    %s62 = sphi 0, %s64
    %s65 = sphi 0, %s62
    %s66 = sphi 0, %s65
    %s82 = sphi 0, %s66
    %s86 = sphi 0, %s86
    %s88 = sphi 0, %s86
    %s89 = sphi 0, %s88
    %s103 = sphi 0, %s89
    %s107 = sphi 0, %s107
    %s109 = sphi 0, %s107
    %s110 = sphi 0, %s109
    %s124 = sphi 0, %s110
    %s130 = sphi 0, %s132
    %s133 = sphi 0, %s130
    %s134 = sphi 0, %s133
    %s150 = sphi 0, %s134
    %s158 = sphi 0, %s160
    %s161 = sphi 0, %s158
    %s162 = sphi 0, %s161
    %s178 = sphi 0, %s162
  $region4: #{_lambda_.2} parent=0 // loop_header_branch
    %15 = sbr.rel (%p13) target = $region8
  $region5: #{_lambda_.2} parent=0 // loop_body
    %s17 = ssub.s32 %s12, 1
    %s18 = ssub.s32 %s12, 2
    %s25 = sadd.s32 1, %s20
    %p26 = scmp.ge.s32.totalorder %s25, 2
    %s27 = scalar_select %p26, 0, %s25
    %s28 = sadd.s32 1, %s19
    %s29 = scalar_select %p26, %s28, %s19
    %p30 = scmp.ge.s32.totalorder %s29, 2
    %s31 = scalar_select %p30, 0, %s29
    %s32 = ssub.s32 %s19, %s31
    %s33 = ssub.s32 %s20, %s27
    %s34 = sor.u32 %s32, %s33
    %p35 = scmp.eq.s32.totalorder %s34, 0
    %s37 = sadd.s32 %s36, 1
    %s38 = scalar_select %p35, %s36, %s37
    %p41 = pneg %p35
    %p42 = scmp.eq.s32.totalorder %s12, 3
    %p43 = por %p41, %p42
    %p44 = scmp.ne.s32.totalorder %s36, %s39
    %p45 = scmp.eq.s32.totalorder %s12, 0
    %p46 = por %p44, %p45
    %p47 = scmp.ne.s32.totalorder %s36, %s39
    %p48 = scmp.eq.s32.totalorder %s17, 3
    %p49 = por %p47, %p48
    %p50 = scmp.ne.s32.totalorder %s39, %s40
    %p51 = scmp.eq.s32.totalorder %s17, 0
    %p52 = por %p50, %p51
    %p53 = scmp.ne.s32.totalorder %s39, %s40
    %p54 = scmp.eq.s32.totalorder %s18, 3
    %p55 = por %p53, %p54
    %p57 = scmp.ne.s32.totalorder %s40, %s56
    %p58 = scmp.eq.s32.totalorder %s18, 0
    %p59 = por %p57, %p58
    %s60 = ssub.s32 %s20, %s27
    %p61 = scmp.eq.s32.totalorder %s60, 0
    %s63 = sadd.s32 %s62, 1
    %s64 = scalar_select %p61, %s62, %s63
    %p67 = pneg %p61
    %p68 = scmp.eq.s32.totalorder %s12, 3
    %p69 = por %p67, %p68
    %p70 = scmp.ne.s32.totalorder %s62, %s65
    %p71 = scmp.eq.s32.totalorder %s12, 0
    %p72 = por %p70, %p71
    %p73 = scmp.ne.s32.totalorder %s62, %s65
    %p74 = scmp.eq.s32.totalorder %s17, 3
    %p75 = por %p73, %p74
    %p76 = scmp.ne.s32.totalorder %s65, %s66
    %p77 = scmp.eq.s32.totalorder %s17, 0
    %p78 = por %p76, %p77
    %p79 = scmp.ne.s32.totalorder %s65, %s66
    %p80 = scmp.eq.s32.totalorder %s18, 3
    %p81 = por %p79, %p80
    %p83 = scmp.ne.s32.totalorder %s66, %s82
    %p84 = scmp.eq.s32.totalorder %s18, 0
    %p85 = por %p83, %p84
    %s87 = sadd.s32 %s86, 1
    %p90 = scmp.eq.s32.totalorder %s12, 3
    %p91 = scmp.ne.s32.totalorder %s86, %s88
    %p92 = scmp.eq.s32.totalorder %s12, 0
    %p93 = por %p91, %p92
    %p94 = scmp.ne.s32.totalorder %s86, %s88
    %p95 = scmp.eq.s32.totalorder %s17, 3
    %p96 = por %p94, %p95
    %p97 = scmp.ne.s32.totalorder %s88, %s89
    %p98 = scmp.eq.s32.totalorder %s17, 0
    %p99 = por %p97, %p98
    %p100 = scmp.ne.s32.totalorder %s88, %s89
    %p101 = scmp.eq.s32.totalorder %s18, 3
    %p102 = por %p100, %p101
    %p104 = scmp.ne.s32.totalorder %s89, %s103
    %p105 = scmp.eq.s32.totalorder %s18, 0
    %p106 = por %p104, %p105
    %s108 = sadd.s32 %s107, 1
    %p111 = scmp.eq.s32.totalorder %s12, 3
    %p112 = scmp.ne.s32.totalorder %s107, %s109
    %p113 = scmp.eq.s32.totalorder %s12, 0
    %p114 = por %p112, %p113
    %p115 = scmp.ne.s32.totalorder %s107, %s109
    %p116 = scmp.eq.s32.totalorder %s17, 3
    %p117 = por %p115, %p116
    %p118 = scmp.ne.s32.totalorder %s109, %s110
    %p119 = scmp.eq.s32.totalorder %s17, 0
    %p120 = por %p118, %p119
    %p121 = scmp.ne.s32.totalorder %s109, %s110
    %p122 = scmp.eq.s32.totalorder %s18, 3
    %p123 = por %p121, %p122
    %p125 = scmp.ne.s32.totalorder %s110, %s124
    %p126 = scmp.eq.s32.totalorder %s18, 0
    %p127 = por %p125, %p126
    %s128 = ssub.s32 %s19, %s31
    %p129 = scmp.eq.s32.totalorder %s128, 0
    %s131 = sadd.s32 %s130, 1
    %s132 = scalar_select %p129, %s130, %s131
    %p135 = pneg %p129
    %p136 = scmp.eq.s32.totalorder %s12, 3
    %p137 = por %p135, %p136
    %p138 = scmp.ne.s32.totalorder %s130, %s133
    %p139 = scmp.eq.s32.totalorder %s12, 0
    %p140 = por %p138, %p139
    %p141 = scmp.ne.s32.totalorder %s130, %s133
    %p142 = scmp.eq.s32.totalorder %s17, 3
    %p143 = por %p141, %p142
    %p144 = scmp.ne.s32.totalorder %s133, %s134
    %p145 = scmp.eq.s32.totalorder %s17, 0
    %p146 = por %p144, %p145
    %p147 = scmp.ne.s32.totalorder %s133, %s134
    %p148 = scmp.eq.s32.totalorder %s18, 3
    %p149 = por %p147, %p148
    %p151 = scmp.ne.s32.totalorder %s134, %s150
    %p152 = scmp.eq.s32.totalorder %s18, 0
    %p153 = por %p151, %p152
    %s154 = ssub.s32 %s19, %s31
    %s155 = ssub.s32 %s20, %s27
    %s156 = sor.u32 %s154, %s155
    %p157 = scmp.eq.s32.totalorder %s156, 0
    %s159 = sadd.s32 %s158, 1
    %s160 = scalar_select %p157, %s158, %s159
    %p163 = pneg %p157
    %p164 = scmp.eq.s32.totalorder %s12, 3
    %p165 = por %p163, %p164
    %p166 = scmp.ne.s32.totalorder %s158, %s161
    %p167 = scmp.eq.s32.totalorder %s12, 0
    %p168 = por %p166, %p167
    %p169 = scmp.ne.s32.totalorder %s158, %s161
    %p170 = scmp.eq.s32.totalorder %s17, 3
    %p171 = por %p169, %p170
    %p172 = scmp.ne.s32.totalorder %s161, %s162
    %p173 = scmp.eq.s32.totalorder %s17, 0
    %p174 = por %p172, %p173
    %p175 = scmp.ne.s32.totalorder %s161, %s162
    %p176 = scmp.eq.s32.totalorder %s18, 3
    %p177 = por %p175, %p176
    %p179 = scmp.ne.s32.totalorder %s162, %s178
    %p180 = scmp.eq.s32.totalorder %s18, 0
    %p181 = por %p179, %p180
    %p182 = scmp.le.s32.totalorder 1, %s12
    %p183 = scmp.lt.s32.totalorder %s12, 5
    %p184 = pnand %p182, %p183
    %p185 = pneg %p184
    // Predicated region
    $region9: #{_lambda_.2} parent=5 // pred_check
      _
    $region10: #{_lambda_.2} parent=5 // pred_check_branch
      %187 = sbr.rel (%p184) target = $region12
    $region11: #{_lambda_.2} parent=5 // pred_region
      %s188 = ssub.s32 %s12, 1
      // Predicated region
      $region13: #{_lambda_.2} parent=11 // pred_check
        %p189 = pneg %p99
      $region14: #{_lambda_.2} parent=11 // pred_check_branch
        %191 = sbr.rel (%p189) target = $region16
      $region15: #{_lambda_.2} parent=11 // pred_region
        _
      $region16: #{_lambda_.2} parent=11 // pred_fallthru
        _
      // Predicated region
      $region17: #{_lambda_.2} parent=11 // pred_check
        %p192 = pneg %p120
      $region18: #{_lambda_.2} parent=11 // pred_check_branch
        %194 = sbr.rel (%p192) target = $region20
      $region19: #{_lambda_.2} parent=11 // pred_region
        _
      $region20: #{_lambda_.2} parent=11 // pred_fallthru
        _
    $region12: #{_lambda_.2} parent=5 // pred_fallthru
      _
    %p195 = scmp.lt.s32.totalorder %s12, 4
    // Predicated region
    $region21: #{_lambda_.2} parent=5 // pred_check
      %p196 = pneg %p195
    $region22: #{_lambda_.2} parent=5 // pred_check_branch
      %198 = sbr.rel (%p196) target = $region24
    $region23: #{_lambda_.2} parent=5 // pred_region
      // Predicated region
      $region25: #{_lambda_.2} parent=23 // pred_check
        %p199 = pneg %p46
      $region26: #{_lambda_.2} parent=23 // pred_check_branch
        %201 = sbr.rel (%p199) target = $region28
      $region27: #{_lambda_.2} parent=23 // pred_region
        %p202 = scmp.lt.s32.totalorder %s19, 1
        %s203 = scalar_select %p202, %s19, 1
        %p204 = scmp.lt.s32.totalorder %s20, 1
        %s205 = scalar_select %p204, %s20, 1
        %s206 = smul.addr %s203, 2
        %s207 = sadd.s32 %s205, %s206
        %s208 = smul.addr %s207, 8
        %s209 = scalar_lea.vmem %s0, %s208
      $region28: #{_lambda_.2} parent=23 // pred_fallthru
        _
      // Predicated region
      $region29: #{_lambda_.2} parent=23 // pred_check
        %p210 = pneg %p72
      $region30: #{_lambda_.2} parent=23 // pred_check_branch
        %212 = sbr.rel (%p210) target = $region32
      $region31: #{_lambda_.2} parent=23 // pred_region
        %s213 = smul.u32 16, %s20
        %p214 = scmp.lt.s32.totalorder %s213, 31
        %s215 = scalar_select %p214, %s213, 31
        %s216 = smul.addr %s215, 8
        %s217 = scalar_lea.vmem %s1, %s216
        %s218 = smul.u32 16, %s20
      $region32: #{_lambda_.2} parent=23 // pred_fallthru
        _
    $region24: #{_lambda_.2} parent=5 // pred_fallthru
      _
    %p219 = scmp.le.s32.totalorder 1, %s12
    %p220 = scmp.lt.s32.totalorder %s12, 5
    %p221 = pnand %p219, %p220
    %p222 = pneg %p221
    // Predicated region
    $region33: #{_lambda_.2} parent=5 // pred_check
      _
    $region34: #{_lambda_.2} parent=5 // pred_check_branch
      %224 = sbr.rel (%p221) target = $region36
    $region35: #{_lambda_.2} parent=5 // pred_region
      %s225 = ssub.s32 %s12, 1
      %p226 = scmp.lt.s32.totalorder %s21, 1
      %s227 = scalar_select %p226, %s21, 1
      %p228 = scmp.lt.s32.totalorder %s22, 1
      %s229 = scalar_select %p228, %s22, 1
      %s230 = smul.addr %s227, 2
      %s231 = sadd.s32 %s229, %s230
      %s232 = smul.addr %s231, 8
      %s233 = scalar_lea.vmem %s0, %s232
      %p234 = pneg %p52
      %p235 = pneg %p49
      %s236 = smul.u32 16, %s22
      %p237 = scmp.lt.s32.totalorder %s236, 31
      %s238 = scalar_select %p237, %s236, 31
      %s239 = smul.addr %s238, 8
      %s240 = scalar_lea.vmem %s1, %s239
      %p241 = pneg %p78
      %p242 = pneg %p75
      %p243 = pneg %p99
      %p244 = pneg %p96
      %p245 = pneg %p120
      %p246 = pneg %p117
      %p247 = pneg %p146
      %p248 = pneg %p143
      %p249 = scmp.lt.s32.totalorder %s21, 1
      %s250 = scalar_select %p249, %s21, 1
      %s251 = smul.addr %s250, 4
      %s252 = smul.addr %s251, 8
      %s253 = scalar_lea.vmem %s4, %s252
      %p254 = pneg %p174
      %p255 = pneg %p171
      %p256 = scmp.lt.s32.totalorder %s21, 1
      %s257 = scalar_select %p256, %s21, 1
      %p258 = scmp.lt.s32.totalorder %s22, 1
      %s259 = scalar_select %p258, %s22, 1
      %s260 = smul.addr %s257, 10
      %s261 = sadd.s32 %s259, %s260
      %s262 = smul.addr %s261, 8
      %s263 = scalar_lea.vmem %s5, %s262
      %p264 = scmp.lt.s32.totalorder %s21, 1
      %s265 = scalar_select %p264, %s21, 1
      %p266 = scmp.lt.s32.totalorder %s22, 1
      %s267 = scalar_select %p266, %s22, 1
      %s268 = smul.addr %s265, 2
      %s269 = sadd.s32 %s267, %s268
      %s270 = smul.addr %s269, 8
      %s271 = scalar_lea.vmem %s0, %s270
      %s272 = smul.u32 16, %s22
      %p273 = scmp.lt.s32.totalorder %s272, 31
      %s274 = scalar_select %p273, %s272, 31
      %s275 = smul.addr %s274, 8
      %s276 = scalar_lea.vmem %s1, %s275
      %s277 = smul.u32 16, %s22
      %p278 = scmp.lt.s32.totalorder %s21, 1
      %s279 = scalar_select %p278, %s21, 1
      %s280 = smul.addr %s279, 4
      %s281 = smul.addr %s280, 8
      %s282 = scalar_lea.vmem %s4, %s281
      %p283 = scmp.lt.s32.totalorder %s21, 1
      %s284 = scalar_select %p283, %s21, 1
      %p285 = scmp.lt.s32.totalorder %s22, 1
      %s286 = scalar_select %p285, %s22, 1
      %s287 = smul.addr %s284, 10
      %s288 = sadd.s32 %s286, %s287
      %s289 = smul.addr %s288, 8
      %s290 = scalar_lea.vmem %s5, %s289
      %p291 = scmp.eq.s32.totalorder %s22, 0
      // Predicated region
      $region37: #{_lambda_.2} parent=35 // pred_check
        %p292 = pneg %p291
      $region38: #{_lambda_.2} parent=35 // pred_check_branch
        %294 = sbr.rel (%p292) target = $region40
      $region39: #{_lambda_.2} parent=35 // pred_region
        %vm295 = vcmask 408576
        %296 = vst.msk [vmem:[#allocation2] sm:$0xff] %vm295, 0.0
      $region40: #{_lambda_.2} parent=35 // pred_fallthru
        _
      %v297 = vld [vmem:[#allocation2] sm:$0xff]
      %v298 = vld [vmem:[%s271] sm:$0xff]
      %v299 = vld [vmem:[%s276] sm:$0xff]
      %v300 = vld [vmem:[%s276 + $0x8] sm:$0xff]
      %v301 = vld [vmem:[%s276 + $0x10] sm:$0xff]
      %v302 = vld [vmem:[%s276 + $0x18] sm:$0xff]
      %v303 = vld [vmem:[%s276 + $0x20] sm:$0xff]
      %v304 = vld [vmem:[%s276 + $0x28] sm:$0xff]
      %v305 = vld [vmem:[%s276 + $0x30] sm:$0xff]
      %v306 = vld [vmem:[%s276 + $0x38] sm:$0xff]
      %v307 = vld [vmem:[%s276 + $0x40] sm:$0xff]
      %v308 = vld [vmem:[%s276 + $0x48] sm:$0xff]
      %v309 = vld [vmem:[%s276 + $0x50] sm:$0xff]
      %v310 = vld [vmem:[%s276 + $0x58] sm:$0xff]
      %v311 = vld [vmem:[%s276 + $0x60] sm:$0xff]
      %v312 = vld [vmem:[%s276 + $0x68] sm:$0xff]
      %v313 = vld [vmem:[%s276 + $0x70] sm:$0xff]
      %v314 = vld [vmem:[%s276 + $0x78] sm:$0xff]
      %315 = vmatprep.subr.mxu0 0.0
      %316 = vmatpush1.msra.mxu0 %v299
      %317 = vmatprep.subr.mxu0 0.0
      %318 = vmatpush1.msra.mxu0 %v300
      %319 = vmatprep.subr.mxu0 0.0
      %320 = vmatpush1.msra.mxu0 %v301
      %321 = vmatprep.subr.mxu0 0.0
      %322 = vmatpush1.msra.mxu0 %v302
      %323 = vmatprep.subr.mxu0 0.0
      %324 = vmatpush1.msra.mxu0 %v303
      %325 = vmatprep.subr.mxu0 0.0
      %326 = vmatpush1.msra.mxu0 %v304
      %327 = vmatprep.subr.mxu0 0.0
      %328 = vmatpush1.msra.mxu0 %v305
      %329 = vmatprep.subr.mxu0 0.0
      %330 = vmatpush1.msra.mxu0 %v306
      %331 = vmatprep.subr.mxu0 0.0
      %332 = vmatpush1.msra.mxu0 %v307
      %333 = vmatprep.subr.mxu0 0.0
      %334 = vmatpush1.msra.mxu0 %v308
      %335 = vmatprep.subr.mxu0 0.0
      %336 = vmatpush1.msra.mxu0 %v309
      %337 = vmatprep.subr.mxu0 0.0
      %338 = vmatpush1.msra.mxu0 %v310
      %339 = vmatprep.subr.mxu0 0.0
      %340 = vmatpush1.msra.mxu0 %v311
      %341 = vmatprep.subr.mxu0 0.0
      %342 = vmatpush1.msra.mxu0 %v312
      %343 = vmatprep.subr.mxu0 0.0
      %344 = vmatpush1.msra.mxu0 %v313
      %345 = vmatprep.subr.mxu0 0.0
      %346 = vmatpush1.msra.mxu0 %v314
      %347 = vmatprep.subr.mxu0 0.0
      %348 = vmatpush1.msra.mxu0 0.0
      %349 = vmatprep.subr.mxu0 0.0
      %350 = vmatpush1.msra.mxu0 0.0
      %351 = vmatprep.subr.mxu0 0.0
      %352 = vmatpush1.msra.mxu0 0.0
      %353 = vmatprep.subr.mxu0 0.0
      %354 = vmatpush1.msra.mxu0 0.0
      %355 = vmatprep.subr.mxu0 0.0
      %356 = vmatpush1.msra.mxu0 0.0
      %357 = vmatprep.subr.mxu0 0.0
      %358 = vmatpush1.msra.mxu0 0.0
      %359 = vmatprep.subr.mxu0 0.0
      %360 = vmatpush1.msra.mxu0 0.0
      %361 = vmatprep.subr.mxu0 0.0
      %362 = vmatpush1.msra.mxu0 0.0
      %363 = vmatprep.subr.mxu0 0.0
      %364 = vmatpush1.msra.mxu0 0.0
      %365 = vmatprep.subr.mxu0 0.0
      %366 = vmatpush1.msra.mxu0 0.0
      %367 = vmatprep.subr.mxu0 0.0
      %368 = vmatpush1.msra.mxu0 0.0
      %369 = vmatprep.subr.mxu0 0.0
      %370 = vmatpush1.msra.mxu0 0.0
      %371 = vmatprep.subr.mxu0 0.0
      %372 = vmatpush1.msra.mxu0 0.0
      %373 = vmatprep.subr.mxu0 0.0
      %374 = vmatpush1.msra.mxu0 0.0
      %375 = vmatprep.subr.mxu0 0.0
      %376 = vmatpush1.msra.mxu0 0.0
      %377 = vmatprep.subr.mxu0 0.0
      %378 = vmatpush1.msra.mxu0 0.0
      %379 = vmatprep.mubr.f32.mxu0 0.0
      %380 = vmatmul.mubr.f32.gmra.mrb[0].mxu0 %v298
      %v381 = vpop.f32.mrb[0].mxu0
      %v382 = vadd.f32 0.0, %v381
      %v383 = vpop.f32.mrb[0].mxu0
      %384 = vdwg.mxu0
      %v385 = vadd.f32 %v297, %v382
      %vm386 = vcmask 408576
      %387 = vst.msk [vmem:[#allocation2] sm:$0xff] %vm386, %v385
      %v388 = vld [vmem:[%s271] sm:$0xff]
      %389 = vst [vmem:[%s290] sm:$0xff] %v388
      %p390 = scmp.eq.s32.totalorder %s22, 1
      // Predicated region
      $region41: #{_lambda_.2} parent=35 // pred_check
        %p391 = pneg %p390
      $region42: #{_lambda_.2} parent=35 // pred_check_branch
        %393 = sbr.rel (%p391) target = $region44
      $region43: #{_lambda_.2} parent=35 // pred_region
        %v394 = vld [vmem:[%s2] sm:$0xf]
        %v395 = vld [vmem:[%s2 + $0x4] sm:$0xf]
        %v396 = vld [vmem:[%s2 + $0x8] sm:$0xf]
        %v397 = vld [vmem:[%s2 + $0xc] sm:$0xf]
        %v398 = vunpack.c.l.bf16 %v394
        %v399 = vunpack.c.l.bf16 %v395
        %v400 = vunpack.c.l.bf16 %v396
        %v401 = vunpack.c.l.bf16 %v397
        %v402 = vld [vmem:[#allocation2] sm:$0xff]
        %v403 = vld [vmem:[%s3] sm:$0xff]
        %v404 = vld [vmem:[%s3 + $0x8] sm:$0xff]
        %v405 = vld [vmem:[%s3 + $0x10] sm:$0xff]
        %v406 = vld [vmem:[%s3 + $0x18] sm:$0xff]
        %vm407 = vcmask 64512
        %v409 = vsel %vm407, %v398, 0
        %v412 = vsel %vm407, %v399, 0
        %v415 = vsel %vm407, %v400, 0
        %v418 = vsel %vm407, %v401, 0
        %420 = vmatprep.subr.mxu0 0.0
        %421 = vmatpush1.msra.mxu0 %v402
        %422 = vmatprep.subr.mxu0 0.0
        %423 = vmatpush1.msra.mxu0 0.0
        %424 = vmatprep.subr.mxu0 0.0
        %425 = vmatpush1.msra.mxu0 0.0
        %426 = vmatprep.subr.mxu0 0.0
        %427 = vmatpush1.msra.mxu0 0.0
        %428 = vmatprep.subr.mxu0 0.0
        %429 = vmatpush1.msra.mxu0 0.0
        %430 = vmatprep.subr.mxu0 0.0
        %431 = vmatpush1.msra.mxu0 0.0
        %432 = vmatprep.subr.mxu0 0.0
        %433 = vmatpush1.msra.mxu0 0.0
        %434 = vmatprep.subr.mxu0 0.0
        %435 = vmatpush1.msra.mxu0 0.0
        %436 = vmatprep.subr.mxu0 0.0
        %437 = vmatpush1.msra.mxu0 0.0
        %438 = vmatprep.subr.mxu0 0.0
        %439 = vmatpush1.msra.mxu0 0.0
        %440 = vmatprep.subr.mxu0 0.0
        %441 = vmatpush1.msra.mxu0 0.0
        %442 = vmatprep.subr.mxu0 0.0
        %443 = vmatpush1.msra.mxu0 0.0
        %444 = vmatprep.subr.mxu0 0.0
        %445 = vmatpush1.msra.mxu0 0.0
        %446 = vmatprep.subr.mxu0 0.0
        %447 = vmatpush1.msra.mxu0 0.0
        %448 = vmatprep.subr.mxu0 0.0
        %449 = vmatpush1.msra.mxu0 0.0
        %450 = vmatprep.subr.mxu0 0.0
        %451 = vmatpush1.msra.mxu0 0.0
        %452 = vmatprep.subr.mxu0 0.0
        %453 = vmatpush1.msra.mxu0 0.0
        %454 = vmatprep.subr.mxu0 0.0
        %455 = vmatpush1.msra.mxu0 0.0
        %456 = vmatprep.subr.mxu0 0.0
        %457 = vmatpush1.msra.mxu0 0.0
        %458 = vmatprep.subr.mxu0 0.0
        %459 = vmatpush1.msra.mxu0 0.0
        %460 = vmatprep.subr.mxu0 0.0
        %461 = vmatpush1.msra.mxu0 0.0
        %462 = vmatprep.subr.mxu0 0.0
        %463 = vmatpush1.msra.mxu0 0.0
        %464 = vmatprep.subr.mxu0 0.0
        %465 = vmatpush1.msra.mxu0 0.0
        %466 = vmatprep.subr.mxu0 0.0
        %467 = vmatpush1.msra.mxu0 0.0
        %468 = vmatprep.subr.mxu0 0.0
        %469 = vmatpush1.msra.mxu0 0.0
        %470 = vmatprep.subr.mxu0 0.0
        %471 = vmatpush1.msra.mxu0 0.0
        %472 = vmatprep.subr.mxu0 0.0
        %473 = vmatpush1.msra.mxu0 0.0
        %474 = vmatprep.subr.mxu0 0.0
        %475 = vmatpush1.msra.mxu0 0.0
        %476 = vmatprep.subr.mxu0 0.0
        %477 = vmatpush1.msra.mxu0 0.0
        %478 = vmatprep.subr.mxu0 0.0
        %479 = vmatpush1.msra.mxu0 0.0
        %480 = vmatprep.subr.mxu0 0.0
        %481 = vmatpush1.msra.mxu0 0.0
        %482 = vmatprep.subr.mxu0 0.0
        %483 = vmatpush1.msra.mxu0 0.0
        %484 = vmatprep.mubr.f32.mxu0 0.0
        %485 = vmatmul.mubr.f32.gmra.mrb[0].mxu0 %v409
        %v486 = vpop.f32.mrb[0].mxu0
        %v487 = vadd.f32 %v403, %v486
        %v488 = vpop.f32.mrb[0].mxu0
        %489 = vmatprep.mubr.f32.mxu0 0.0
        %490 = vmatmul.mubr.f32.gmra.mrb[0].mxu0 %v412
        %v491 = vpop.f32.mrb[0].mxu0
        %v492 = vadd.f32 %v404, %v491
        %v493 = vpop.f32.mrb[0].mxu0
        %494 = vmatprep.mubr.f32.mxu0 0.0
        %495 = vmatmul.mubr.f32.gmra.mrb[0].mxu0 %v415
        %v496 = vpop.f32.mrb[0].mxu0
        %v497 = vadd.f32 %v405, %v496
        %v498 = vpop.f32.mrb[0].mxu0
        %499 = vmatprep.mubr.f32.mxu0 0.0
        %500 = vmatmul.mubr.f32.gmra.mrb[0].mxu0 %v418
        %v501 = vpop.f32.mrb[0].mxu0
        %v502 = vadd.f32 %v406, %v501
        %v503 = vpop.f32.mrb[0].mxu0
        %504 = vdwg.mxu0
        %v505 = vmax.f32 %v487, 0.0
        %v506 = vmax.f32 %v492, 0.0
        %v507 = vmax.f32 %v497, 0.0
        %v508 = vmax.f32 %v502, 0.0
        %509 = vst.msk [vmem:[%s282] sm:$0xff] %vm386, %v505
        %510 = vst.msk [vmem:[%s282 + $0x8] sm:$0xff] %vm386, %v506
        %511 = vst.msk [vmem:[%s282 + $0x10] sm:$0xff] %vm386, %v507
        %512 = vst.msk [vmem:[%s282 + $0x18] sm:$0xff] %vm386, %v508
      $region44: #{_lambda_.2} parent=35 // pred_fallthru
        _
      %p513 = scmp.lt.s32.totalorder %s21, 1
      %s514 = scalar_select %p513, %s21, 1
      %s515 = smul.addr %s514, 4
      %s516 = smul.addr %s515, 8
      %s517 = scalar_lea.vmem %s4, %s516
      %p518 = scmp.lt.s32.totalorder %s21, 1
      %s519 = scalar_select %p518, %s21, 1
      %p520 = scmp.lt.s32.totalorder %s22, 1
      %s521 = scalar_select %p520, %s22, 1
      %s522 = smul.addr %s519, 10
      %s523 = sadd.s32 %s521, %s522
      %s524 = smul.addr %s523, 8
      %s525 = scalar_lea.vmem %s5, %s524
      // Predicated region
      $region45: #{_lambda_.2} parent=35 // pred_check
        %p526 = pneg %p143
      $region46: #{_lambda_.2} parent=35 // pred_check_branch
        %528 = sbr.rel (%p526) target = $region48
      $region47: #{_lambda_.2} parent=35 // pred_region
        _
      $region48: #{_lambda_.2} parent=35 // pred_fallthru
        _
      // Predicated region
      $region49: #{_lambda_.2} parent=35 // pred_check
        %p529 = pneg %p171
      $region50: #{_lambda_.2} parent=35 // pred_check_branch
        %531 = sbr.rel (%p529) target = $region52
      $region51: #{_lambda_.2} parent=35 // pred_region
        _
      $region52: #{_lambda_.2} parent=35 // pred_fallthru
        _
    $region36: #{_lambda_.2} parent=5 // pred_fallthru
      _
    %p532 = scmp.le.s32.totalorder 2, %s12
    // Predicated region
    $region53: #{_lambda_.2} parent=5 // pred_check
      %p533 = pneg %p532
    $region54: #{_lambda_.2} parent=5 // pred_check_branch
      %535 = sbr.rel (%p533) target = $region56
    $region55: #{_lambda_.2} parent=5 // pred_region
      %s536 = ssub.s32 %s12, 2
      // Predicated region
      $region57: #{_lambda_.2} parent=55 // pred_check
        %p537 = pneg %p149
      $region58: #{_lambda_.2} parent=55 // pred_check_branch
        %539 = sbr.rel (%p537) target = $region60
      $region59: #{_lambda_.2} parent=55 // pred_region
        %p540 = scmp.lt.s32.totalorder %s23, 1
        %s541 = scalar_select %p540, %s23, 1
        %s542 = smul.addr %s541, 4
        %s543 = smul.addr %s542, 8
        %s544 = scalar_lea.vmem %s4, %s543
      $region60: #{_lambda_.2} parent=55 // pred_fallthru
        _
      // Predicated region
      $region61: #{_lambda_.2} parent=55 // pred_check
        %p545 = pneg %p177
      $region62: #{_lambda_.2} parent=55 // pred_check_branch
        %547 = sbr.rel (%p545) target = $region64
      $region63: #{_lambda_.2} parent=55 // pred_region
        %p548 = scmp.lt.s32.totalorder %s23, 1
        %s549 = scalar_select %p548, %s23, 1
        %p550 = scmp.lt.s32.totalorder %s24, 1
        %s551 = scalar_select %p550, %s24, 1
        %s552 = smul.addr %s549, 10
        %s553 = sadd.s32 %s551, %s552
        %s554 = smul.addr %s553, 8
        %s555 = scalar_lea.vmem %s5, %s554
      $region64: #{_lambda_.2} parent=55 // pred_fallthru
        _
    $region56: #{_lambda_.2} parent=5 // pred_fallthru
      _
  $region6: #{_lambda_.2} parent=0 // loop_footer
    %s16 = sadd.s32 1, %s12
  $region7: #{_lambda_.2} parent=0 // loop_footer_branch
    %11 = sbr.rel target = $region3
  $region8: #{_lambda_.2} parent=0 // loop_exit
    _

</llo_original>
